<compile_context>
chip_gen: v6e
topology: v6e:2x2x1
jax: 0.10.0
libtpu: 0.0.40
codegen_flags: <defaults>
</compile_context>

<pallas_src>
import functools
import math

import jax
import jax.numpy as jnp
from jax import lax
from jax.experimental import pallas as pl
from jax.experimental.pallas import tpu as pltpu

_LN_EPS = 1e-5


def _round_up(a, b):
    return (a + b - 1) // b * b


def _cdiv(a, b):
    return (a + b - 1) // b


def _regressor_kernel(x_ref, w_ref, b_ref, gamma_ref, beta_ref, out_ref, xn_ref):
    # x_ref:     (tm, K)   input rows, native dtype (full feature axis)
    # w_ref:     (K, tn)   pre-packed weight tile (transposed, N-padded, bf16)
    # b_ref:     (1, tn)   bias tile (f32, N-padded)
    # gamma_ref: (1, K)    LayerNorm scale (f32)
    # beta_ref:  (1, K)    LayerNorm shift (f32)
    # out_ref:   (tm, tn)  output tile (f32)
    # xn_ref:    (tm, K)   VMEM scratch: normalized rows, cached across the N axis

    # The x block and its LN statistics do not depend on the output-column index j,
    # so compute them only at j == 0 and reuse the cached bf16 result afterwards.
    @pl.when(pl.program_id(1) == 0)
    def _():
        x = x_ref[...].astype(jnp.float32)
        mean = jnp.mean(x, axis=-1, keepdims=True)
        mean_sq = jnp.mean(x * x, axis=-1, keepdims=True)      # single-pass stats
        var = jnp.maximum(mean_sq - mean * mean, 0.0)
        xn = (x - mean) * lax.rsqrt(var + _LN_EPS)
        xn = xn * gamma_ref[...] + beta_ref[...]
        # TODO(synk): train-mode dropout (pltpu.prng_seed + prng_random_bits mask);
        # nn.Dropout is identity in eval/inference mode, which is what we implement.
        xn_ref[...] = xn.astype(xn_ref.dtype)

    # bf16 x bf16 MXU matmul with f32 accumulation, then bias add.
    y = jnp.dot(xn_ref[...], w_ref[...], preferred_element_type=jnp.float32)
    out_ref[...] = (y + b_ref[...]).astype(out_ref.dtype)


def prepack_params(params, matmul_dtype=jnp.bfloat16):
    """One-time parameter packing (NOT in the per-call forward path)."""
    weight = jnp.asarray(params["weight"])              # (N, K)  nn.Linear layout
    bias = jnp.asarray(params["bias"], jnp.float32)     # (N,)
    gamma = jnp.asarray(params["gamma"], jnp.float32)   # (K,)
    beta = jnp.asarray(params["beta"], jnp.float32)     # (K,)
    N, K = weight.shape
    N_pad = _round_up(N, 128)                            # lane-dense output slab
    w_kn = jnp.pad(weight.T.astype(matmul_dtype), ((0, 0), (0, N_pad - N)))   # (K, N_pad)
    b_row = jnp.pad(bias, (0, N_pad - N)).reshape(1, N_pad)                   # (1, N_pad)
    return dict(
        w_kn=w_kn,
        b_row=b_row,
        gamma_row=gamma.reshape(1, K),
        beta_row=beta.reshape(1, K),
        out_features=int(N),
    )


@functools.partial(jax.jit, static_argnames=("out_features",))
def _forward_2d(x2, w_kn, b_row, gamma_row, beta_row, *, out_features):
    M, K = x2.shape
    N_pad = w_kn.shape[1]

    # ---- generation-aware, trace-time tiling decisions ----
    kind = jax.devices()[0].device_kind.lower()
    is_v5 = "v5" in kind
    is_v7 = "v7" in kind

    # Output-column tile: 256 fills the 2x256^2 MXU on v6e/v7x; 128 is native on v5e.
    pref_tn = 128 if is_v5 else 256
    if N_pad <= pref_tn:
        tn = N_pad
    elif N_pad % pref_tn == 0:
        tn = pref_tn
    else:
        tn = 128

    # Row tile: big on v5e/v6e (128 MiB VMEM, amortize ~0.35us/grid-step),
    # smaller on v7x (64 MiB VMEM, 2 TensorCores to keep fed).
    x_bytes = x2.dtype.itemsize
    w_bytes = w_kn.dtype.itemsize
    budget = (40 if is_v7 else 88) * 1024 * 1024
    fixed = 2 * K * tn * w_bytes + 2 * tn * 4 + 3 * K * 4           # weight dbuf + bias + gamma/beta
    per_row = 2 * K * x_bytes + K * w_bytes + 2 * tn * 4            # x dbuf + xn scratch + out dbuf
    tm_cap = max(8, ((max(budget - fixed, 0)) // max(per_row, 1)) // 8 * 8)
    # TODO(synk): K-tiled path (running E[x]/E[x^2] sums + f32 accumulator scratch) for
    # in_features so large that a single (tm, K) + (K, tn) tile pair exceeds VMEM.

    tm_target = 128 if is_v7 else 256
    tm = max(8, min(tm_target, _round_up(M, 8), tm_cap))
    if is_v7 and M > 8 and _cdiv(M, tm) < 2:
        # Guarantee >= 2 row blocks so both v7x TensorCores get work.
        tm = max(8, _round_up(_cdiv(M, 2), 8))

    grid = (_cdiv(M, tm), N_pad // tn)

    compiler_kwargs = dict(dimension_semantics=("parallel", "arbitrary"))
    est_vmem = fixed + per_row * tm
    if est_vmem > 24 * 1024 * 1024:
        compiler_kwargs["vmem_limit_bytes"] = int(
            min((56 if is_v7 else 112) * 1024 * 1024, 2 * est_vmem))

    out = pl.pallas_call(
        _regressor_kernel,
        out_shape=jax.ShapeDtypeStruct((M, N_pad), jnp.float32),
        grid=grid,
        in_specs=[
            pl.BlockSpec((tm, K), lambda i, j: (i, 0)),   # x rows (unpadded, native dtype)
            pl.BlockSpec((K, tn), lambda i, j: (0, j)),   # prepacked bf16 weight
            pl.BlockSpec((1, tn), lambda i, j: (0, j)),   # bias
            pl.BlockSpec((1, K), lambda i, j: (0, 0)),    # gamma
            pl.BlockSpec((1, K), lambda i, j: (0, 0)),    # beta
        ],
        out_specs=pl.BlockSpec((tm, tn), lambda i, j: (i, j)),
        scratch_shapes=[pltpu.VMEM((tm, K), w_kn.dtype)],  # cached normalized rows
        compiler_params=pltpu.CompilerParams(**compiler_kwargs),
    )(x2, w_kn, b_row, gamma_row, beta_row)

    if out_features != N_pad:
        out = out[:, :out_features]
    return out


def simple_regressor_forward(x, packed):
    """x: (..., in_features). Returns (..., out_features) float32."""
    lead = x.shape[:-1]
    K = x.shape[-1]
    M = int(math.prod(lead)) if lead else 1
    out = _forward_2d(
        x.reshape(M, K), packed["w_kn"], packed["b_row"],
        packed["gamma_row"], packed["beta_row"],
        out_features=packed["out_features"],
    )
    return out.reshape(*lead, packed["out_features"])


def init_params(key, in_features, out_features):
    """Deterministic init mirroring nn.LayerNorm / nn.Linear parameter shapes."""
    k = 1.0 / jnp.sqrt(jnp.float32(in_features))
    kw, kb = jax.random.split(key)
    weight = jax.random.uniform(kw, (out_features, in_features), jnp.float32,
                                minval=-k, maxval=k)
    bias = jax.random.uniform(kb, (out_features,), jnp.float32, minval=-k, maxval=k)
    gamma = jnp.ones((in_features,), jnp.float32)
    beta = jnp.zeros((in_features,), jnp.float32)
    return dict(weight=weight, bias=bias, gamma=gamma, beta=beta)


def reference_forward(x, params):
    """Pure-JAX f32 reference (LayerNorm -> eval Dropout -> Linear)."""
    xf = x.astype(jnp.float32)
    mean = jnp.mean(xf, axis=-1, keepdims=True)
    var = jnp.mean((xf - mean) ** 2, axis=-1, keepdims=True)
    xn = (xf - mean) * lax.rsqrt(var + _LN_EPS)
    xn = xn * params["gamma"] + params["beta"]
    return xn @ params["weight"].T + params["bias"]


if __name__ == "__main__":
    key = jax.random.PRNGKey(0)
    k_x, k_p = jax.random.split(key)

    # Small shapes consistent with a regressor head on token features:
    # batch=2, seq=8, in_features=256, out_features=1 (dropout identity at inference).
    B, S, IN_F, OUT_F = 2, 8, 256, 1
    x = jax.random.normal(k_x, (B, S, IN_F), jnp.float32)
    params = init_params(k_p, IN_F, OUT_F)
    packed = prepack_params(params)            # one-time pack (bf16 (K, N_pad) weight)

    out = simple_regressor_forward(x, packed)
    out = jax.block_until_ready(out)

    ref = reference_forward(x, params)
    assert out.shape == (B, S, OUT_F)
    # bf16 MXU operands with f32 accumulation -> relaxed tolerance vs f32 reference.
    assert jnp.allclose(out, ref, atol=5e-2, rtol=5e-2), "mismatch vs reference"

    print("KERNEL_OK")
</pallas_src>

<mosaic_0001>
module attributes {stable_mosaic.version = 11 : i64} {
  func.func @_regressor_kernel(%arg0: i32, %arg1: i32, %arg2: memref<16x256xf32, #tpu.memory_space<vmem>>, %arg3: memref<256x128xbf16, #tpu.memory_space<vmem>>, %arg4: memref<1x128xf32, #tpu.memory_space<vmem>>, %arg5: memref<1x256xf32, #tpu.memory_space<vmem>>, %arg6: memref<1x256xf32, #tpu.memory_space<vmem>>, %arg7: memref<16x128xf32, #tpu.memory_space<vmem>>, %arg8: memref<16x256xbf16, #tpu.memory_space<vmem>>) attributes {dimension_semantics = [#tpu.dimension_semantics<parallel>, #tpu.dimension_semantics<arbitrary>], iteration_bounds = array<i64: 1, 1>, scalar_prefetch = 0 : i64, scratch_operands = 1 : i64, tpu.core_type = #tpu.core_type<tc>, window_params = [{transform_indices = @transform_0, window_bounds = array<i64: 16, 256>}, {transform_indices = @transform_1, window_bounds = array<i64: 256, 128>}, {transform_indices = @transform_2, window_bounds = array<i64: 1, 128>}, {pipeline_mode = #tpu.pipeline_mode<synchronous>, transform_indices = @transform_3, window_bounds = array<i64: 1, 256>}, {pipeline_mode = #tpu.pipeline_mode<synchronous>, transform_indices = @transform_4, window_bounds = array<i64: 1, 256>}, {transform_indices = @transform_5, window_bounds = array<i64: 16, 128>}]} {
    %c0_i32 = arith.constant 0 : i32
    %0 = arith.cmpi eq, %arg1, %c0_i32 : i32
    %1 = arith.extui %0 : i1 to i32
    %c0_i32_0 = arith.constant 0 : i32
    %2 = arith.cmpi ne, %1, %c0_i32_0 : i32
    scf.if %2 {
      %c0_8 = arith.constant 0 : index
      %c0_9 = arith.constant 0 : index
      %10 = vector.load %arg2[%c0_8, %c0_9] : memref<16x256xf32, #tpu.memory_space<vmem>>, vector<16x256xf32>
      %cst_10 = arith.constant dense<0.000000e+00> : vector<16xf32>
      %11 = vector.multi_reduction <add>, %10, %cst_10 [1] : vector<16x256xf32> to vector<16xf32>
      %12 = vector.shape_cast %11 : vector<16xf32> to vector<16x1xf32>
      %cst_11 = arith.constant 2.560000e+02 : f32
      %13 = vector.broadcast %cst_11 : f32 to vector<16x1xf32>
      %14 = arith.divf %12, %13 : vector<16x1xf32>
      %15 = arith.mulf %10, %10 : vector<16x256xf32>
      %cst_12 = arith.constant dense<0.000000e+00> : vector<16xf32>
      %16 = vector.multi_reduction <add>, %15, %cst_12 [1] : vector<16x256xf32> to vector<16xf32>
      %17 = vector.shape_cast %16 : vector<16xf32> to vector<16x1xf32>
      %cst_13 = arith.constant 2.560000e+02 : f32
      %18 = vector.broadcast %cst_13 : f32 to vector<16x1xf32>
      %19 = arith.divf %17, %18 : vector<16x1xf32>
      %20 = arith.mulf %14, %14 : vector<16x1xf32>
      %21 = arith.subf %19, %20 : vector<16x1xf32>
      %cst_14 = arith.constant 0.000000e+00 : f32
      %22 = vector.broadcast %cst_14 : f32 to vector<16x1xf32>
      %23 = arith.maximumf %21, %22 : vector<16x1xf32>
      %24 = vector.broadcast %14 : vector<16x1xf32> to vector<16x256xf32>
      %25 = arith.subf %10, %24 : vector<16x256xf32>
      %cst_15 = arith.constant 9.99999974E-6 : f32
      %26 = vector.broadcast %cst_15 : f32 to vector<16x1xf32>
      %27 = arith.addf %23, %26 : vector<16x1xf32>
      %28 = math.rsqrt %27 : vector<16x1xf32>
      %29 = vector.broadcast %28 : vector<16x1xf32> to vector<16x256xf32>
      %30 = arith.mulf %25, %29 : vector<16x256xf32>
      %c0_16 = arith.constant 0 : index
      %c0_17 = arith.constant 0 : index
      %31 = vector.load %arg5[%c0_16, %c0_17] : memref<1x256xf32, #tpu.memory_space<vmem>>, vector<1x256xf32>
      %32 = vector.broadcast %31 : vector<1x256xf32> to vector<16x256xf32>
      %33 = arith.mulf %30, %32 : vector<16x256xf32>
      %c0_18 = arith.constant 0 : index
      %c0_19 = arith.constant 0 : index
      %34 = vector.load %arg6[%c0_18, %c0_19] : memref<1x256xf32, #tpu.memory_space<vmem>>, vector<1x256xf32>
      %35 = vector.broadcast %34 : vector<1x256xf32> to vector<16x256xf32>
      %36 = arith.addf %33, %35 : vector<16x256xf32>
      %37 = arith.truncf %36 : vector<16x256xf32> to vector<16x256xbf16>
      %c0_20 = arith.constant 0 : index
      %c0_21 = arith.constant 0 : index
      %38 = vector.load %arg8[%c0_20, %c0_21] : memref<16x256xbf16, #tpu.memory_space<vmem>>, vector<16x256xbf16>
      tpu.vector_store %arg8[%c0_20, %c0_21], %37 {strides = array<i32>} : memref<16x256xbf16, #tpu.memory_space<vmem>>, vector<16x256xbf16>,
    } else {
    }
    %c0 = arith.constant 0 : index
    %c0_1 = arith.constant 0 : index
    %3 = vector.load %arg8[%c0, %c0_1] : memref<16x256xbf16, #tpu.memory_space<vmem>>, vector<16x256xbf16>
    %c0_2 = arith.constant 0 : index
    %c0_3 = arith.constant 0 : index
    %4 = vector.load %arg3[%c0_2, %c0_3] : memref<256x128xbf16, #tpu.memory_space<vmem>>, vector<256x128xbf16>
    %cst = arith.constant dense<0.000000e+00> : vector<16x128xf32>
    %5 = tpu.matmul %3, %4, %cst {dimension_numbers = #tpu.dot_dimension_numbers<[1], [0], [0], [1], [0, 0, 1, 1], [], []>} : vector<16x256xbf16>, vector<256x128xbf16>, vector<16x128xf32> -> vector<16x128xf32>
    %c0_4 = arith.constant 0 : index
    %c0_5 = arith.constant 0 : index
    %6 = vector.load %arg4[%c0_4, %c0_5] : memref<1x128xf32, #tpu.memory_space<vmem>>, vector<1x128xf32>
    %7 = vector.broadcast %6 : vector<1x128xf32> to vector<16x128xf32>
    %8 = arith.addf %5, %7 : vector<16x128xf32>
    %c0_6 = arith.constant 0 : index
    %c0_7 = arith.constant 0 : index
    %9 = vector.load %arg7[%c0_6, %c0_7] : memref<16x128xf32, #tpu.memory_space<vmem>>, vector<16x128xf32>
    tpu.vector_store %arg7[%c0_6, %c0_7], %8 {strides = array<i32>} : memref<16x128xf32, #tpu.memory_space<vmem>>, vector<16x128xf32>,
    return
  }
  func.func @transform_0(%arg0: i32, %arg1: i32) -> (i32, i32) {
    %c0_i32 = arith.constant 0 : i32
    %c0_i32_0 = arith.constant 0 : i32
    return %arg0, %c0_i32 : i32, i32
  }
  func.func @transform_1(%arg0: i32, %arg1: i32) -> (i32, i32) {
    %c0_i32 = arith.constant 0 : i32
    %c0_i32_0 = arith.constant 0 : i32
    return %c0_i32, %arg1 : i32, i32
  }
  func.func @transform_2(%arg0: i32, %arg1: i32) -> (i32, i32) {
    %c0_i32 = arith.constant 0 : i32
    %c0_i32_0 = arith.constant 0 : i32
    return %c0_i32, %arg1 : i32, i32
  }
  func.func @transform_3(%arg0: i32, %arg1: i32) -> (i32, i32) {
    %c0_i32 = arith.constant 0 : i32
    %c0_i32_0 = arith.constant 0 : i32
    %c0_i32_1 = arith.constant 0 : i32
    return %c0_i32, %c0_i32_0 : i32, i32
  }
  func.func @transform_4(%arg0: i32, %arg1: i32) -> (i32, i32) {
    %c0_i32 = arith.constant 0 : i32
    %c0_i32_0 = arith.constant 0 : i32
    %c0_i32_1 = arith.constant 0 : i32
    return %c0_i32, %c0_i32_0 : i32, i32
  }
  func.func @transform_5(%arg0: i32, %arg1: i32) -> (i32, i32) {
    %c0_i32 = arith.constant 0 : i32
    return %arg0, %arg1 : i32, i32
  }
}

</mosaic_0001>

<llo_original>
// kernel: _forward_2d.1
$region0: #{_forward_2d.1}
  #allocation0 [shape = 'u32[]', space=smem, size = 0x4, offset = 0x4, fixed_abs, tag = 'smem constant byte address 0x4 - core index']
  #allocation1 [shape = 'u32[144,128]{1,0:T(1,128)}', space=vmem, size = 0x12000, scoped, tag = 'internal scratch']
  #allocation2 [shape = 'bf16[16,256]{1,0:T(8,128)(2,1)}', space=vmem, size = 0x2000, scoped, tag = 'scratch operand']
  %s0 = inlined_call_operand.hbm [shape: f32[16,256], index: 0, kind: input, shape index: {}]
  %s1 = inlined_call_operand.hbm [shape: bf16[256,128], index: 1, kind: input, shape index: {}]
  %s2 = inlined_call_operand.vmem [shape: f32[1,128], index: 2, kind: input, shape index: {}]
  %s3 = inlined_call_operand.vmem [shape: f32[1,256], index: 3, kind: input, shape index: {}]
  %s4 = inlined_call_operand.vmem [shape: f32[1,256], index: 4, kind: input, shape index: {}]
  %s5 = inlined_call_operand.vmem [shape: f32[16,128], index: 5, kind: output, shape index: {}]
  %s6 = sld [smem:[#allocation0]]
  $region42: #{_forward_2d.1} parent=0
    _
  %s8 = ssub.s32 1, %s6
  %s9 = scalar_select 0, %s8, %s6
  $region1: #{_forward_2d.1} parent=0
    #allocation3 [shape = 'u8[16384]{0}', space=vmem, size = 0x4000, scoped, tag = 'input window, operand 0, single buffered']
    #allocation4 [shape = 's32[1]{0}', space=sflag, size = 0x4, scoped, tag = 'scoped memory for _forward_2d.1']
    #allocation5 [shape = 'u8[65536]{0}', space=vmem, size = 0x10000, scoped, tag = 'input window, operand 1, single buffered']
    #allocation6 [shape = 's32[1]{0}', space=sflag, size = 0x4, scoped, tag = 'scoped memory for _forward_2d.1']
    %10 = vsyncpa [#allocation4], 0
    %11 = vsyncpa [#allocation6], 0
    // Predicated region
    $region2: #{_forward_2d.1} parent=1 // pred_check
      _
    $region3: #{_forward_2d.1} parent=1 // pred_check_branch
      %13 = sbr.rel (0) target = $region5
    $region4: #{_forward_2d.1} parent=1 // pred_region
      %s15 = ssub.s32 512, 512
      %16 = vsyncadd [#allocation4], %s15
      %s17 = sshll.u32 [#allocation3], 4
      %s18 = int_to_ptr.vmem [resolvable:$true] %s17
      %23 = dma.hbm_to_vmem [thread:$0]  %s0, 512, %s18, [#allocation4], 256, 256, 16
    $region5: #{_forward_2d.1} parent=1 // pred_fallthru
      _
    // Predicated region
    $region6: #{_forward_2d.1} parent=1 // pred_check
      _
    $region7: #{_forward_2d.1} parent=1 // pred_check_branch
      %25 = sbr.rel (0) target = $region9
    $region8: #{_forward_2d.1} parent=1 // pred_region
      %s27 = ssub.s32 2048, 2048
      %28 = vsyncadd [#allocation6], %s27
      %s29 = sshll.u32 [#allocation5], 4
      %s30 = int_to_ptr.vmem [resolvable:$true] %s29
      %35 = dma.hbm_to_vmem [thread:$0]  %s1, 2048, %s30, [#allocation6], 64, 64, 4
    $region9: #{_forward_2d.1} parent=1 // pred_fallthru
      _
    // Predicated region
    $region10: #{_forward_2d.1} parent=1 // pred_check
      _
    $region11: #{_forward_2d.1} parent=1 // pred_check_branch
      %37 = sbr.rel (0) target = $region13
    $region12: #{_forward_2d.1} parent=1 // pred_region
      _
    $region13: #{_forward_2d.1} parent=1 // pred_fallthru
      _
    // Predicated region
    $region14: #{_forward_2d.1} parent=1 // pred_check
      _
    $region15: #{_forward_2d.1} parent=1 // pred_check_branch
      %39 = sbr.rel (0) target = $region17
    $region16: #{_forward_2d.1} parent=1 // pred_region
      _
    $region17: #{_forward_2d.1} parent=1 // pred_fallthru
      _
    // Predicated region
    $region18: #{_forward_2d.1} parent=1 // pred_check
      _
    $region19: #{_forward_2d.1} parent=1 // pred_check_branch
      %41 = sbr.rel (0) target = $region21
    $region20: #{_forward_2d.1} parent=1 // pred_region
      _
    $region21: #{_forward_2d.1} parent=1 // pred_fallthru
      _
    // Predicated region
    $region22: #{_forward_2d.1} parent=1 // pred_check
      _
    $region23: #{_forward_2d.1} parent=1 // pred_check_branch
      %43 = sbr.rel (0) target = $region25
    $region24: #{_forward_2d.1} parent=1 // pred_region
      %44 = dma.done [#allocation4], 512
    $region25: #{_forward_2d.1} parent=1 // pred_fallthru
      _
    // Predicated region
    $region26: #{_forward_2d.1} parent=1 // pred_check
      _
    $region27: #{_forward_2d.1} parent=1 // pred_check_branch
      %46 = sbr.rel (0) target = $region29
    $region28: #{_forward_2d.1} parent=1 // pred_region
      %47 = dma.done [#allocation6], 2048
    $region29: #{_forward_2d.1} parent=1 // pred_fallthru
      _
    %p49 = scmp.eq.s32.totalorder 0, 0
    // Predicated region
    $region30: #{_forward_2d.1} parent=1 // pred_check
      %p50 = pneg %p49
    $region31: #{_forward_2d.1} parent=1 // pred_check_branch
      %52 = sbr.rel (%p50) target = $region33
    $region32: #{_forward_2d.1} parent=1 // pred_region
      %v53 = vld [vmem:[#allocation3] sm:$0xff]
      %v54 = vld [vmem:[#allocation3 + $0x8] sm:$0xff]
      %v55 = vld [vmem:[#allocation3 + $0x10] sm:$0xff]
      %v56 = vld [vmem:[#allocation3 + $0x18] sm:$0xff]
      %v57 = vadd.f32 %v53, %v54
      %58 = vadd.xlane.f32.xlu0 %v57
      %v59 = vpop.xlane.xlu0 %58
      %v60 = vadd.f32 %v55, %v56
      %61 = vadd.xlane.f32.xlu0 %v60
      %v62 = vpop.xlane.xlu0 %61
      %v63 = vrcp.pop 256.0
      %v64 = vmul.f32 %v59, %v63
      %v65 = vmul.f32 %v62, %v63
      %v66 = vmul.f32 %v53, %v53
      %v67 = vmul.f32 %v54, %v54
      %v68 = vmul.f32 %v55, %v55
      %v69 = vmul.f32 %v56, %v56
      %v70 = vadd.f32 %v66, %v67
      %71 = vadd.xlane.f32.xlu0 %v70
      %v72 = vpop.xlane.xlu0 %71
      %v73 = vadd.f32 %v68, %v69
      %74 = vadd.xlane.f32.xlu0 %v73
      %v75 = vpop.xlane.xlu0 %74
      %v76 = vmul.f32 %v72, %v63
      %v77 = vmul.f32 %v75, %v63
      %v78 = vmul.f32 %v64, %v64
      %v79 = vmul.f32 %v65, %v65
      %v80 = vsub.f32 %v76, %v78
      %v81 = vsub.f32 %v77, %v79
      %v82 = vmax.f32 %v80, 0.0
      %v83 = vmax.f32 %v81, 0.0
      %v84 = vsub.f32 %v53, %v64
      %v85 = vsub.f32 %v54, %v64
      %v86 = vsub.f32 %v55, %v65
      %v87 = vsub.f32 %v56, %v65
      %v88 = vadd.f32 %v82, 1e-05
      %v89 = vadd.f32 %v83, 1e-05
      %v90 = vrsqrt.pop %v88
      %v91 = vrsqrt.pop %v89
      %v92 = vmul.f32 %v84, %v90
      %v93 = vmul.f32 %v85, %v90
      %v94 = vmul.f32 %v86, %v91
      %v95 = vmul.f32 %v87, %v91
      %v96 = vld [vmem:[%s3] sm:$0x3]
      %v98 = vlaneseq
      %v99 = vshrl.u32 %v98, 7
      %v100 = vsub.s32 0, %v99
      %v101 = vrot.slane %v96, %v100
      %v102 = vlaneseq
      %v103 = vshrl.u32 %v102, 7
      %v104 = vsub.s32 1, %v103
      %v105 = vrot.slane %v96, %v104
      %v108 = vmul.f32 %v92, %v101
      %v109 = vmul.f32 %v93, %v105
      %v110 = vmul.f32 %v94, %v101
      %v111 = vmul.f32 %v95, %v105
      %v112 = vld [vmem:[%s4] sm:$0x3]
      %v114 = vlaneseq
      %v115 = vshrl.u32 %v114, 7
      %v116 = vsub.s32 0, %v115
      %v117 = vrot.slane %v112, %v116
      %v118 = vlaneseq
      %v119 = vshrl.u32 %v118, 7
      %v120 = vsub.s32 1, %v119
      %v121 = vrot.slane %v112, %v120
      %v124 = vadd.f32 %v108, %v117
      %v125 = vadd.f32 %v109, %v121
      %v126 = vadd.f32 %v110, %v117
      %v127 = vadd.f32 %v111, %v121
      %v128 = vpack.c.bf16 %v126, %v124
      %v129 = vpack.c.bf16 %v127, %v125
      %v132 = vunpack.c.l.b16 %v128
      %v133 = vunpack.c.l.b16 %v129
      %v134 = vunpack.c.h.b16 %v128
      %v135 = vunpack.c.h.b16 %v129
      %v136 = vpack.c.b16 %v133, %v132
      %v137 = vpack.c.b16 %v135, %v134
      %140 = vst [vmem:[#allocation2] sm:$0xff] %v136
      %141 = vst [vmem:[#allocation2 + $0x8] sm:$0xff] %v137
    $region33: #{_forward_2d.1} parent=1 // pred_fallthru
      _
    %v142 = vld [vmem:[#allocation2] sm:$0xff]
    %v143 = vld [vmem:[#allocation2 + $0x8] sm:$0xff]
    %v144 = vld [vmem:[#allocation5] sm:$0xf]
    %v145 = vld [vmem:[#allocation5 + $0x4] sm:$0xf]
    %v146 = vld [vmem:[#allocation5 + $0x8] sm:$0xf]
    %v147 = vld [vmem:[#allocation5 + $0xc] sm:$0xf]
    %v148 = vld [vmem:[#allocation5 + $0x10] sm:$0xf]
    %v149 = vld [vmem:[#allocation5 + $0x14] sm:$0xf]
    %v150 = vld [vmem:[#allocation5 + $0x18] sm:$0xf]
    %v151 = vld [vmem:[#allocation5 + $0x1c] sm:$0xf]
    %v152 = vld [vmem:[#allocation5 + $0x20] sm:$0xf]
    %v153 = vld [vmem:[#allocation5 + $0x24] sm:$0xf]
    %v154 = vld [vmem:[#allocation5 + $0x28] sm:$0xf]
    %v155 = vld [vmem:[#allocation5 + $0x2c] sm:$0xf]
    %v156 = vld [vmem:[#allocation5 + $0x30] sm:$0xf]
    %v157 = vld [vmem:[#allocation5 + $0x34] sm:$0xf]
    %v158 = vld [vmem:[#allocation5 + $0x38] sm:$0xf]
    %v159 = vld [vmem:[#allocation5 + $0x3c] sm:$0xf]
    %v160 = vld [vmem:[#allocation5 + $0x40] sm:$0xf]
    %v161 = vld [vmem:[#allocation5 + $0x44] sm:$0xf]
    %v162 = vld [vmem:[#allocation5 + $0x48] sm:$0xf]
    %v163 = vld [vmem:[#allocation5 + $0x4c] sm:$0xf]
    %v164 = vld [vmem:[#allocation5 + $0x50] sm:$0xf]
    %v165 = vld [vmem:[#allocation5 + $0x54] sm:$0xf]
    %v166 = vld [vmem:[#allocation5 + $0x58] sm:$0xf]
    %v167 = vld [vmem:[#allocation5 + $0x5c] sm:$0xf]
    %v168 = vld [vmem:[#allocation5 + $0x60] sm:$0xf]
    %v169 = vld [vmem:[#allocation5 + $0x64] sm:$0xf]
    %v170 = vld [vmem:[#allocation5 + $0x68] sm:$0xf]
    %v171 = vld [vmem:[#allocation5 + $0x6c] sm:$0xf]
    %v172 = vld [vmem:[#allocation5 + $0x70] sm:$0xf]
    %v173 = vld [vmem:[#allocation5 + $0x74] sm:$0xf]
    %v174 = vld [vmem:[#allocation5 + $0x78] sm:$0xf]
    %v175 = vld [vmem:[#allocation5 + $0x7c] sm:$0xf]
    %v176 = vld [vmem:[%s2] sm:$0x1]
    %v178 = vlaneseq
    %v179 = vshrl.u32 %v178, 7
    %v180 = vsub.s32 0, %v179
    %v181 = vrot.slane %v176, %v180
    %v185 = vunpack.c.l.b16 %v142
    %v186 = vunpack.c.h.b16 %v142
    %v187 = vunpack.c.l.b16 %v143
    %v188 = vunpack.c.h.b16 %v143
    %v189 = vpack.c.b16 %v187, %v185
    %v190 = vpack.c.b16 %v188, %v186
    %v225 = vunpack.c.l.b16 %v144
    %v226 = vunpack.c.l.b16 %v145
    %v227 = vunpack.c.l.b16 %v146
    %v228 = vunpack.c.l.b16 %v147
    %v229 = vunpack.c.l.b16 %v148
    %v230 = vunpack.c.l.b16 %v149
    %v231 = vunpack.c.l.b16 %v150
    %v232 = vunpack.c.l.b16 %v151
    %v233 = vunpack.c.l.b16 %v152
    %v234 = vunpack.c.l.b16 %v153
    %v235 = vunpack.c.l.b16 %v154
    %v236 = vunpack.c.l.b16 %v155
    %v237 = vunpack.c.l.b16 %v156
    %v238 = vunpack.c.l.b16 %v157
    %v239 = vunpack.c.l.b16 %v158
    %v240 = vunpack.c.l.b16 %v159
    %v241 = vunpack.c.l.b16 %v160
    %v242 = vunpack.c.l.b16 %v161
    %v243 = vunpack.c.l.b16 %v162
    %v244 = vunpack.c.l.b16 %v163
    %v245 = vunpack.c.l.b16 %v164
    %v246 = vunpack.c.l.b16 %v165
    %v247 = vunpack.c.l.b16 %v166
    %v248 = vunpack.c.l.b16 %v167
    %v249 = vunpack.c.l.b16 %v168
    %v250 = vunpack.c.l.b16 %v169
    %v251 = vunpack.c.l.b16 %v170
    %v252 = vunpack.c.l.b16 %v171
    %v253 = vunpack.c.l.b16 %v172
    %v254 = vunpack.c.l.b16 %v173
    %v255 = vunpack.c.l.b16 %v174
    %v256 = vunpack.c.l.b16 %v175
    %v257 = vpack.c.b16 %v226, %v225
    %v258 = vpack.c.b16 %v228, %v227
    %v259 = vpack.c.b16 %v230, %v229
    %v260 = vpack.c.b16 %v232, %v231
    %v261 = vpack.c.b16 %v234, %v233
    %v262 = vpack.c.b16 %v236, %v235
    %v263 = vpack.c.b16 %v238, %v237
    %v264 = vpack.c.b16 %v240, %v239
    %v265 = vpack.c.b16 %v242, %v241
    %v266 = vpack.c.b16 %v244, %v243
    %v267 = vpack.c.b16 %v246, %v245
    %v268 = vpack.c.b16 %v248, %v247
    %v269 = vpack.c.b16 %v250, %v249
    %v270 = vpack.c.b16 %v252, %v251
    %v271 = vpack.c.b16 %v254, %v253
    %v272 = vpack.c.b16 %v256, %v255
    %289 = vmatprep.subr.bf16.mxu0 0
    %290 = vmatpush1.bf16.msra.mxu0 %v264
    %291 = vmatprep.subr.bf16.mxu0 0
    %292 = vmatpush1.bf16.msra.mxu0 %v263
    %293 = vmatprep.subr.bf16.mxu0 0
    %294 = vmatpush1.bf16.msra.mxu0 %v262
    %295 = vmatprep.subr.bf16.mxu0 0
    %296 = vmatpush1.bf16.msra.mxu0 %v261
    %297 = vmatprep.subr.bf16.mxu0 0
    %298 = vmatpush1.bf16.msra.mxu0 %v260
    %299 = vmatprep.subr.bf16.mxu0 0
    %300 = vmatpush1.bf16.msra.mxu0 %v259
    %301 = vmatprep.subr.bf16.mxu0 0
    %302 = vmatpush1.bf16.msra.mxu0 %v258
    %303 = vmatprep.subr.bf16.mxu0 0
    %304 = vmatpush1.bf16.msra.mxu0 %v257
    %305 = vmatprep.subr.bf16.mxu0 0
    %306 = vmatpush2.bf16.msra.mxu0 %v272
    %307 = vmatprep.subr.bf16.mxu0 0
    %308 = vmatpush2.bf16.msra.mxu0 %v271
    %309 = vmatprep.subr.bf16.mxu0 0
    %310 = vmatpush2.bf16.msra.mxu0 %v270
    %311 = vmatprep.subr.bf16.mxu0 0
    %312 = vmatpush2.bf16.msra.mxu0 %v269
    %313 = vmatprep.subr.bf16.mxu0 0
    %314 = vmatpush2.bf16.msra.mxu0 %v268
    %315 = vmatprep.subr.bf16.mxu0 0
    %316 = vmatpush2.bf16.msra.mxu0 %v267
    %317 = vmatprep.subr.bf16.mxu0 0
    %318 = vmatpush2.bf16.msra.mxu0 %v266
    %319 = vmatprep.subr.bf16.mxu0 0
    %320 = vmatpush2.bf16.msra.mxu0 %v265
    %321 = vmatprep.mubr.bf16.mxu0 %v190
    %322 = vmatmul.mubr.bf16.gmra.mxu0 %v189
    %v323 = vpop.f32.mrf.mxu0
    %v324 = vadd.f32 %v181, %v323
    %v325 = vpop.f32.mrf.mxu0
    %v326 = vpop.f32.mrf.mxu0
    %v327 = vadd.f32 %v181, %v326
    %v328 = vpop.f32.mrf.mxu0
    %329 = vdwg.mxu0
    %330 = vst [vmem:[%s5] sm:$0xff] %v324
    %331 = vst [vmem:[%s5 + $0x8] sm:$0xff] %v327
    // Predicated region
    $region34: #{_forward_2d.1} parent=1 // pred_check
      _
    $region35: #{_forward_2d.1} parent=1 // pred_check_branch
      %333 = sbr.rel (0) target = $region37
    $region36: #{_forward_2d.1} parent=1 // pred_region
      _
    $region37: #{_forward_2d.1} parent=1 // pred_fallthru
      _
    // Predicated region
    $region38: #{_forward_2d.1} parent=1 // pred_check
      _
    $region39: #{_forward_2d.1} parent=1 // pred_check_branch
      %335 = sbr.rel (0) target = $region41
    $region40: #{_forward_2d.1} parent=1 // pred_region
      _
    $region41: #{_forward_2d.1} parent=1 // pred_fallthru
      _
    %336 = vsyncpa [#allocation4], 1
    %337 = vsyncpa [#allocation6], 1

</llo_original>
